<compile_context>
chip_gen: v7x
topology: tpu7x:2x2x1
jax: 0.10.0
libtpu: 0.0.40
codegen_flags: <defaults>
</compile_context>

<pallas_src>
import jax
import jax.numpy as jnp
from jax.experimental import pallas as pl
from jax.experimental.pallas import tpu as pltpu


def _qkv_proj_kernel(x_ref, w_ref, q_ref, k_ref, v_ref):
    """Fused QKV projection: one (Tq, din) @ (din, 3*dout) matmul per row tile."""
    dout = q_ref.shape[-1]
    qkv = jnp.dot(x_ref[...], w_ref[...], preferred_element_type=jnp.float32)
    # q was already scaled by 1/sqrt(dout) via the folded weight.
    q_ref[...] = qkv[:, :dout].astype(q_ref.dtype)
    k_ref[...] = qkv[:, dout:2 * dout].astype(k_ref.dtype)
    v_ref[...] = qkv[:, 2 * dout:].astype(v_ref.dtype)


def _flash_causal_kernel(q_ref, k_ref, v_ref, o_ref, m_ref, l_ref, acc_ref):
    """Online-softmax causal attention for one (q-tile, kv-tile) grid step."""
    block_q = q_ref.shape[0]
    block_k = k_ref.shape[0]
    qi = pl.program_id(0)
    ki = pl.program_id(1)

    @pl.when(ki == 0)
    def _init():
        m_ref[...] = jnp.full_like(m_ref, -jnp.inf)
        l_ref[...] = jnp.zeros_like(l_ref)
        acc_ref[...] = jnp.zeros_like(acc_ref)

    q_start = qi * block_q
    k_start = ki * block_k

    # Skip KV tiles that lie entirely above the causal diagonal.
    @pl.when(k_start <= q_start + (block_q - 1))
    def _compute():
        # scores in f32 via MXU; contraction on last dims avoids an explicit k.T.
        s = jax.lax.dot_general(
            q_ref[...], k_ref[...],
            dimension_numbers=(((1,), (1,)), ((), ())),
            preferred_element_type=jnp.float32)            # (block_q, block_k)

        row = q_start + jax.lax.broadcasted_iota(jnp.int32, (block_q, block_k), 0)
        col = k_start + jax.lax.broadcasted_iota(jnp.int32, (block_q, block_k), 1)
        s = jnp.where(col > row, -jnp.inf, s)

        m_prev = m_ref[...]
        m_new = jnp.maximum(m_prev, jnp.max(s, axis=-1, keepdims=True))
        alpha = jnp.exp(m_prev - m_new)                    # rescale of old state
        p = jnp.exp(s - m_new)                             # unnormalized weights
        l_ref[...] = alpha * l_ref[...] + jnp.sum(p, axis=-1, keepdims=True)
        acc_ref[...] = alpha * acc_ref[...] + jnp.dot(
            p.astype(v_ref.dtype), v_ref[...], preferred_element_type=jnp.float32)
        m_ref[...] = m_new

    @pl.when(ki == pl.num_programs(1) - 1)
    def _finalize():
        inv_l = pl.reciprocal(l_ref[...], approx=True)     # EUP slot, ~free
        o_ref[...] = (acc_ref[...] * inv_l).astype(o_ref.dtype)


def sas_causal(x, wq, wk, wv, *, block_q=128, block_k=128,
               mxu_dtype=jnp.bfloat16, vmem_limit_bytes=48 * 1024 * 1024):
    """x: (L, din); wq/wk/wv: (din, dout) [nn.Linear weights pre-transposed].

    Returns the causal self-attention context of shape (L, dout) in x.dtype.
    """
    L, din = x.shape
    dout = wq.shape[1]
    block_q = min(block_q, L)
    block_k = min(block_k, L)
    if L % block_q or L % block_k:
        # TODO(synk): pad ragged L to a block multiple and mask padded rows in
        # the softmax / final store instead of requiring divisibility.
        raise ValueError("L must be divisible by block_q and block_k")

    scale = 1.0 / (float(dout) ** 0.5)
    # Fold the 1/sqrt(dout) softmax scale into Wq; fuse the three projections.
    w_qkv = jnp.concatenate([wq * scale, wk, wv], axis=1).astype(mxu_dtype)
    x_in = x.astype(mxu_dtype)

    num_q = L // block_q
    num_k = L // block_k

    q, k, v = pl.pallas_call(
        _qkv_proj_kernel,
        out_shape=(
            jax.ShapeDtypeStruct((L, dout), mxu_dtype),
            jax.ShapeDtypeStruct((L, dout), mxu_dtype),
            jax.ShapeDtypeStruct((L, dout), mxu_dtype),
        ),
        grid=(num_q,),
        in_specs=[
            pl.BlockSpec((block_q, din), lambda i: (i, 0)),
            pl.BlockSpec((din, 3 * dout), lambda i: (0, 0)),   # weights resident
        ],
        out_specs=(
            pl.BlockSpec((block_q, dout), lambda i: (i, 0)),
            pl.BlockSpec((block_q, dout), lambda i: (i, 0)),
            pl.BlockSpec((block_q, dout), lambda i: (i, 0)),
        ),
        compiler_params=pltpu.CompilerParams(
            dimension_semantics=("parallel",),
            vmem_limit_bytes=vmem_limit_bytes,
        ),
    )(x_in, w_qkv)

    out = pl.pallas_call(
        _flash_causal_kernel,
        out_shape=jax.ShapeDtypeStruct((L, dout), x.dtype),
        grid=(num_q, num_k),                       # reduction (KV) axis last
        in_specs=[
            pl.BlockSpec((block_q, dout), lambda qi, ki: (qi, 0)),   # q: per q-tile
            pl.BlockSpec((block_k, dout), lambda qi, ki: (ki, 0)),   # k: per kv-tile
            pl.BlockSpec((block_k, dout), lambda qi, ki: (ki, 0)),   # v: per kv-tile
        ],
        out_specs=pl.BlockSpec((block_q, dout), lambda qi, ki: (qi, 0)),
        scratch_shapes=[
            pltpu.VMEM((block_q, 1), jnp.float32),      # running max m
            pltpu.VMEM((block_q, 1), jnp.float32),      # running denom l
            pltpu.VMEM((block_q, dout), jnp.float32),   # output accumulator
        ],
        compiler_params=pltpu.CompilerParams(
            dimension_semantics=("parallel", "arbitrary"),
            vmem_limit_bytes=vmem_limit_bytes,
        ),
    )(q, k, v)
    return out


def _reference(x, wq, wk, wv):
    q = x @ wq
    k = x @ wk
    v = x @ wv
    scores = q @ k.T
    L = scores.shape[0]
    mask = jnp.triu(jnp.ones((L, L), dtype=bool), k=1)
    scores = jnp.where(mask, -jnp.inf, scores)
    w = jax.nn.softmax(scores / jnp.sqrt(jnp.float32(wq.shape[1])), axis=-1)
    return w @ v


def _make_inputs(key, L, din, dout):
    kx, kq, kk, kv = jax.random.split(key, 4)
    x = jax.random.normal(kx, (L, din), dtype=jnp.float32)
    s = 1.0 / jnp.sqrt(jnp.float32(din))
    wq = jax.random.uniform(kq, (din, dout), jnp.float32, -s, s)
    wk = jax.random.uniform(kk, (din, dout), jnp.float32, -s, s)
    wv = jax.random.uniform(kv, (din, dout), jnp.float32, -s, s)
    return x, wq, wk, wv


if __name__ == "__main__":
    root = jax.random.PRNGKey(0)
    key_small, key_big = jax.random.split(root)

    # Case 1: small shapes implied by the module's 2-D forward (L=8, din=dout=32),
    # f32 MXU path (single-tile grid).
    x, wq, wk, wv = _make_inputs(key_small, 8, 32, 32)
    out = jax.block_until_ready(
        sas_causal(x, wq, wk, wv, block_q=8, block_k=8, mxu_dtype=jnp.float32))
    ref = _reference(x, wq, wk, wv)
    assert out.shape == ref.shape
    assert jnp.allclose(out, ref, atol=5e-3, rtol=5e-3), "f32 small-case mismatch"

    # Case 2: tiled path (2x2 grid, exercises causal tile-skip), f32 MXU inputs.
    x2, wq2, wk2, wv2 = _make_inputs(key_big, 256, 64, 64)
    out2 = jax.block_until_ready(
        sas_causal(x2, wq2, wk2, wv2, block_q=128, block_k=128,
                   mxu_dtype=jnp.float32))
    ref2 = _reference(x2, wq2, wk2, wv2)
    assert jnp.allclose(out2, ref2, atol=5e-3, rtol=5e-3), "f32 tiled mismatch"

    # Case 3: default fast path — bf16 MXU inputs, f32 accumulation.
    out3 = jax.block_until_ready(
        sas_causal(x2, wq2, wk2, wv2, block_q=128, block_k=128))
    assert jnp.allclose(out3, ref2, atol=5e-2, rtol=5e-2), "bf16 tiled mismatch"

    print("KERNEL_OK")
</pallas_src>

<mosaic_0001>
module attributes {stable_mosaic.version = 11 : i64} {
  func.func @_qkv_proj_kernel(%arg0: i32, %arg1: memref<8x32xf32, #tpu.memory_space<vmem>>, %arg2: memref<32x96xf32, #tpu.memory_space<vmem>>, %arg3: memref<8x32xf32, #tpu.memory_space<vmem>>, %arg4: memref<8x32xf32, #tpu.memory_space<vmem>>, %arg5: memref<8x32xf32, #tpu.memory_space<vmem>>) attributes {dimension_semantics = [#tpu.dimension_semantics<parallel>], iteration_bounds = array<i64: 1>, scalar_prefetch = 0 : i64, scratch_operands = 0 : i64, tpu.core_type = #tpu.core_type<tc>, window_params = [{transform_indices = @transform_0, window_bounds = array<i64: 8, 32>}, {pipeline_mode = #tpu.pipeline_mode<synchronous>, transform_indices = @transform_1, window_bounds = array<i64: 32, 96>}, {transform_indices = @transform_2, window_bounds = array<i64: 8, 32>}, {transform_indices = @transform_3, window_bounds = array<i64: 8, 32>}, {transform_indices = @transform_4, window_bounds = array<i64: 8, 32>}]} {
    %c0 = arith.constant 0 : index
    %c0_0 = arith.constant 0 : index
    %0 = vector.load %arg1[%c0, %c0_0] : memref<8x32xf32, #tpu.memory_space<vmem>>, vector<8x32xf32>
    %c0_1 = arith.constant 0 : index
    %c0_2 = arith.constant 0 : index
    %1 = vector.load %arg2[%c0_1, %c0_2] : memref<32x96xf32, #tpu.memory_space<vmem>>, vector<32x96xf32>
    %cst = arith.constant dense<0.000000e+00> : vector<8x96xf32>
    %2 = tpu.matmul %0, %1, %cst {dimension_numbers = #tpu.dot_dimension_numbers<[1], [0], [0], [1], [0, 0, 1, 1], [], []>} : vector<8x32xf32>, vector<32x96xf32>, vector<8x96xf32> -> vector<8x96xf32>
    %3 = vector.extract_strided_slice %2 {offsets = [0, 0], sizes = [8, 32], strides = [1, 1]} : vector<8x96xf32> to vector<8x32xf32>
    %c0_3 = arith.constant 0 : index
    %c0_4 = arith.constant 0 : index
    %4 = vector.load %arg3[%c0_3, %c0_4] : memref<8x32xf32, #tpu.memory_space<vmem>>, vector<8x32xf32>
    tpu.vector_store %arg3[%c0_3, %c0_4], %3 {strides = array<i32>} : memref<8x32xf32, #tpu.memory_space<vmem>>, vector<8x32xf32>,
    %5 = vector.extract_strided_slice %2 {offsets = [0, 32], sizes = [8, 32], strides = [1, 1]} : vector<8x96xf32> to vector<8x32xf32>
    %c0_5 = arith.constant 0 : index
    %c0_6 = arith.constant 0 : index
    %6 = vector.load %arg4[%c0_5, %c0_6] : memref<8x32xf32, #tpu.memory_space<vmem>>, vector<8x32xf32>
    tpu.vector_store %arg4[%c0_5, %c0_6], %5 {strides = array<i32>} : memref<8x32xf32, #tpu.memory_space<vmem>>, vector<8x32xf32>,
    %7 = vector.extract_strided_slice %2 {offsets = [0, 64], sizes = [8, 32], strides = [1, 1]} : vector<8x96xf32> to vector<8x32xf32>
    %c0_7 = arith.constant 0 : index
    %c0_8 = arith.constant 0 : index
    %8 = vector.load %arg5[%c0_7, %c0_8] : memref<8x32xf32, #tpu.memory_space<vmem>>, vector<8x32xf32>
    tpu.vector_store %arg5[%c0_7, %c0_8], %7 {strides = array<i32>} : memref<8x32xf32, #tpu.memory_space<vmem>>, vector<8x32xf32>,
    return
  }
  func.func @transform_0(%arg0: i32) -> (i32, i32) {
    %c0_i32 = arith.constant 0 : i32
    %c0_i32_0 = arith.constant 0 : i32
    return %arg0, %c0_i32 : i32, i32
  }
  func.func @transform_1(%arg0: i32) -> (i32, i32) {
    %c0_i32 = arith.constant 0 : i32
    %c0_i32_0 = arith.constant 0 : i32
    %c0_i32_1 = arith.constant 0 : i32
    return %c0_i32, %c0_i32_0 : i32, i32
  }
  func.func @transform_2(%arg0: i32) -> (i32, i32) {
    %c0_i32 = arith.constant 0 : i32
    %c0_i32_0 = arith.constant 0 : i32
    return %arg0, %c0_i32 : i32, i32
  }
  func.func @transform_3(%arg0: i32) -> (i32, i32) {
    %c0_i32 = arith.constant 0 : i32
    %c0_i32_0 = arith.constant 0 : i32
    return %arg0, %c0_i32 : i32, i32
  }
  func.func @transform_4(%arg0: i32) -> (i32, i32) {
    %c0_i32 = arith.constant 0 : i32
    %c0_i32_0 = arith.constant 0 : i32
    return %arg0, %c0_i32 : i32, i32
  }
}

</mosaic_0001>

<llo_original>
// kernel: tpu_custom_call.1
$region0: #{tpu_custom_call.1}
  #allocation0 [shape = 'u32[]', space=smem, size = 0x4, offset = 0x4, fixed_abs, tag = 'smem constant byte address 0x4 - core index']
  #allocation1 [shape = 'u32[144,128]{1,0:T(1,128)}', space=vmem, size = 0x12000, scoped, tag = 'internal scratch']
  %s0 = inlined_call_operand.hbm [shape: f32[8,32], index: 0, kind: input, shape index: {}]
  %s1 = inlined_call_operand.hbm [shape: f32[32,96], index: 1, kind: input, shape index: {}]
  %s2 = inlined_call_operand.hbm [shape: f32[8,32], index: 2, kind: output, shape index: {0}]
  %s3 = inlined_call_operand.hbm [shape: f32[8,32], index: 3, kind: output, shape index: {1}]
  %s4 = inlined_call_operand.hbm [shape: f32[8,32], index: 4, kind: output, shape index: {2}]
  %5 = xla_tuple %s2, %s3, %s4
  %s6 = sld [smem:[#allocation0]]
  $region42: #{tpu_custom_call.1} parent=0
    _
  %s8 = ssub.s32 1, %s6
  %s9 = scalar_select 0, %s8, %s6
  $region1: #{tpu_custom_call.1} parent=0
    #allocation2 [shape = 'u8[4096]{0}', space=vmem, size = 0x1000, scoped, tag = 'input window, operand 0, single buffered']
    #allocation3 [shape = 's32[1]{0}', space=sflag, size = 0x4, scoped, tag = 'scoped memory for tpu_custom_call.1']
    #allocation4 [shape = 's32[1]{0}', space=sflag, size = 0x4, scoped, tag = 'scoped memory for tpu_custom_call.1']
    #allocation5 [shape = 'u8[16384]{0}', space=vmem, size = 0x4000, scoped, tag = 'input window, operand 1, single buffered']
    #allocation6 [shape = 's32[1]{0}', space=sflag, size = 0x4, scoped, tag = 'scoped memory for tpu_custom_call.1']
    #allocation7 [shape = 'u8[4096]{0}', space=vmem, size = 0x1000, scoped, tag = 'output window, operand 0, single buffered']
    #allocation8 [shape = 'u8[4096]{0}', space=vmem, size = 0x1000, scoped, tag = 'output window, operand 1, single buffered']
    #allocation9 [shape = 's32[1]{0}', space=sflag, size = 0x4, scoped, tag = 'scoped memory for tpu_custom_call.1']
    #allocation10 [shape = 'u8[4096]{0}', space=vmem, size = 0x1000, scoped, tag = 'output window, operand 2, single buffered']
    %10 = vsyncpa [#allocation3], 0
    %11 = vsyncpa [#allocation6], 0
    %12 = vsyncpa [#allocation4], 0
    %13 = vsyncpa [#allocation9], 0
    // Predicated region
    $region2: #{tpu_custom_call.1} parent=1 // pred_check
      _
    $region3: #{tpu_custom_call.1} parent=1 // pred_check_branch
      %15 = sbr.rel (0) target = $region5
    $region4: #{tpu_custom_call.1} parent=1 // pred_region
      %s17 = ssub.s32 128, 128
      %18 = vsyncadd [#allocation3], %s17
      %s20 = sshll.u32 [#allocation2], 4
      %s21 = int_to_ptr.vmem [resolvable:$true] %s20
      %23 = dma.hbm_to_vmem [thread:$0]  %s0, 128, %s21, [#allocation3]
    $region5: #{tpu_custom_call.1} parent=1 // pred_fallthru
      _
    // Predicated region
    $region6: #{tpu_custom_call.1} parent=1 // pred_check
      _
    $region7: #{tpu_custom_call.1} parent=1 // pred_check_branch
      %25 = sbr.rel (0) target = $region9
    $region8: #{tpu_custom_call.1} parent=1 // pred_region
      %s27 = ssub.s32 512, 512
      %28 = vsyncadd [#allocation6], %s27
      %s29 = sshll.u32 [#allocation5], 4
      %s30 = int_to_ptr.vmem [resolvable:$true] %s29
      %35 = dma.hbm_to_vmem [thread:$0]  %s1, 512, %s30, [#allocation6], 128, 128, 8
    $region9: #{tpu_custom_call.1} parent=1 // pred_fallthru
      _
    // Predicated region
    $region10: #{tpu_custom_call.1} parent=1 // pred_check
      _
    $region11: #{tpu_custom_call.1} parent=1 // pred_check_branch
      %37 = sbr.rel (0) target = $region13
    $region12: #{tpu_custom_call.1} parent=1 // pred_region
      %38 = dma.done [#allocation3], 128
    $region13: #{tpu_custom_call.1} parent=1 // pred_fallthru
      _
    // Predicated region
    $region14: #{tpu_custom_call.1} parent=1 // pred_check
      _
    $region15: #{tpu_custom_call.1} parent=1 // pred_check_branch
      %40 = sbr.rel (0) target = $region17
    $region16: #{tpu_custom_call.1} parent=1 // pred_region
      %41 = dma.done [#allocation6], 512
    $region17: #{tpu_custom_call.1} parent=1 // pred_fallthru
      _
    %v42 = vld [vmem:[#allocation2] sm:$0xff]
    %v43 = vld [vmem:[#allocation5] sm:$0xff]
    %v44 = vld [vmem:[#allocation5 + $0x8] sm:$0xff]
    %v45 = vld [vmem:[#allocation5 + $0x10] sm:$0xff]
    %v46 = vld [vmem:[#allocation5 + $0x18] sm:$0xff]
    %vm47 = vcmask 261120
    %v49 = vsel %vm47, %v42, 0
    %51 = vmatprep.subr.mxu0 0.0
    %52 = vmatpush1.msra.mxu0 %v43
    %53 = vmatprep.subr.mxu0 0.0
    %54 = vmatpush1.msra.mxu0 %v44
    %55 = vmatprep.subr.mxu0 0.0
    %56 = vmatpush1.msra.mxu0 %v45
    %57 = vmatprep.subr.mxu0 0.0
    %58 = vmatpush1.msra.mxu0 %v46
    %59 = vmatprep.subr.mxu0 0.0
    %60 = vmatpush1.msra.mxu0 0.0
    %61 = vmatprep.subr.mxu0 0.0
    %62 = vmatpush1.msra.mxu0 0.0
    %63 = vmatprep.subr.mxu0 0.0
    %64 = vmatpush1.msra.mxu0 0.0
    %65 = vmatprep.subr.mxu0 0.0
    %66 = vmatpush1.msra.mxu0 0.0
    %67 = vmatprep.subr.mxu0 0.0
    %68 = vmatpush1.msra.mxu0 0.0
    %69 = vmatprep.subr.mxu0 0.0
    %70 = vmatpush1.msra.mxu0 0.0
    %71 = vmatprep.subr.mxu0 0.0
    %72 = vmatpush1.msra.mxu0 0.0
    %73 = vmatprep.subr.mxu0 0.0
    %74 = vmatpush1.msra.mxu0 0.0
    %75 = vmatprep.subr.mxu0 0.0
    %76 = vmatpush1.msra.mxu0 0.0
    %77 = vmatprep.subr.mxu0 0.0
    %78 = vmatpush1.msra.mxu0 0.0
    %79 = vmatprep.subr.mxu0 0.0
    %80 = vmatpush1.msra.mxu0 0.0
    %81 = vmatprep.subr.mxu0 0.0
    %82 = vmatpush1.msra.mxu0 0.0
    %83 = vmatprep.subr.mxu0 0.0
    %84 = vmatpush1.msra.mxu0 0.0
    %85 = vmatprep.subr.mxu0 0.0
    %86 = vmatpush1.msra.mxu0 0.0
    %87 = vmatprep.subr.mxu0 0.0
    %88 = vmatpush1.msra.mxu0 0.0
    %89 = vmatprep.subr.mxu0 0.0
    %90 = vmatpush1.msra.mxu0 0.0
    %91 = vmatprep.subr.mxu0 0.0
    %92 = vmatpush1.msra.mxu0 0.0
    %93 = vmatprep.subr.mxu0 0.0
    %94 = vmatpush1.msra.mxu0 0.0
    %95 = vmatprep.subr.mxu0 0.0
    %96 = vmatpush1.msra.mxu0 0.0
    %97 = vmatprep.subr.mxu0 0.0
    %98 = vmatpush1.msra.mxu0 0.0
    %99 = vmatprep.subr.mxu0 0.0
    %100 = vmatpush1.msra.mxu0 0.0
    %101 = vmatprep.subr.mxu0 0.0
    %102 = vmatpush1.msra.mxu0 0.0
    %103 = vmatprep.subr.mxu0 0.0
    %104 = vmatpush1.msra.mxu0 0.0
    %105 = vmatprep.subr.mxu0 0.0
    %106 = vmatpush1.msra.mxu0 0.0
    %107 = vmatprep.subr.mxu0 0.0
    %108 = vmatpush1.msra.mxu0 0.0
    %109 = vmatprep.subr.mxu0 0.0
    %110 = vmatpush1.msra.mxu0 0.0
    %111 = vmatprep.subr.mxu0 0.0
    %112 = vmatpush1.msra.mxu0 0.0
    %113 = vmatprep.subr.mxu0 0.0
    %114 = vmatpush1.msra.mxu0 0.0
    %115 = vmatprep.mubr.f32.mxu0 0.0
    %116 = vmatmul.mubr.f32.gmra.mrb[0].mxu0 %v49
    %v117 = vpop.f32.mrb[0].mxu0
    %v118 = vadd.f32 0.0, %v117
    %v119 = vpop.f32.mrb[0].mxu0
    %120 = vdwg.mxu0
    %121 = vst.msk [vmem:[#allocation7] sm:$0xff] %vm47, %v118
    %123 = vrot.lane.b32.xlu0 %v118, 96
    %v124 = vpop.permute.xlu0 %123
    %126 = vst.msk [vmem:[#allocation8] sm:$0xff] %vm47, %v124
    %127 = vrot.lane.b32.xlu0 %v118, 64
    %v128 = vpop.permute.xlu0 %127
    %130 = vst.msk [vmem:[#allocation10] sm:$0xff] %vm47, %v128
    // Predicated region
    $region18: #{tpu_custom_call.1} parent=1 // pred_check
      _
    $region19: #{tpu_custom_call.1} parent=1 // pred_check_branch
      %132 = sbr.rel (0) target = $region21
    $region20: #{tpu_custom_call.1} parent=1 // pred_region
      %s134 = ssub.s32 128, 128
      %135 = vsyncadd [#allocation4], %s134
      %s137 = sshll.u32 [#allocation7], 4
      %s138 = int_to_ptr.vmem [resolvable:$true] %s137
      %140 = dma.vmem_to_hbm [thread:$0]  %s138, 128, %s2, [#allocation4]
    $region21: #{tpu_custom_call.1} parent=1 // pred_fallthru
      _
    // Predicated region
    $region22: #{tpu_custom_call.1} parent=1 // pred_check
      _
    $region23: #{tpu_custom_call.1} parent=1 // pred_check_branch
      %142 = sbr.rel (0) target = $region25
    $region24: #{tpu_custom_call.1} parent=1 // pred_region
      %s144 = ssub.s32 128, 128
      %145 = vsyncadd [#allocation9], %s144
      %s147 = sshll.u32 [#allocation8], 4
      %s148 = int_to_ptr.vmem [resolvable:$true] %s147
      %150 = dma.vmem_to_hbm [thread:$0]  %s148, 128, %s3, [#allocation9]
    $region25: #{tpu_custom_call.1} parent=1 // pred_fallthru
      _
    // Predicated region
    $region26: #{tpu_custom_call.1} parent=1 // pred_check
      _
    $region27: #{tpu_custom_call.1} parent=1 // pred_check_branch
      %152 = sbr.rel (0) target = $region29
    $region28: #{tpu_custom_call.1} parent=1 // pred_region
      %s154 = ssub.s32 128, 128
      %155 = vsyncadd [#allocation9], %s154
      %s157 = sshll.u32 [#allocation10], 4
      %s158 = int_to_ptr.vmem [resolvable:$true] %s157
      %160 = dma.vmem_to_hbm [thread:$0]  %s158, 128, %s4, [#allocation9]
    $region29: #{tpu_custom_call.1} parent=1 // pred_fallthru
      _
    // Predicated region
    $region30: #{tpu_custom_call.1} parent=1 // pred_check
      _
    $region31: #{tpu_custom_call.1} parent=1 // pred_check_branch
      %162 = sbr.rel (0) target = $region33
    $region32: #{tpu_custom_call.1} parent=1 // pred_region
      %163 = dma.done [#allocation4], 128
    $region33: #{tpu_custom_call.1} parent=1 // pred_fallthru
      _
    // Predicated region
    $region34: #{tpu_custom_call.1} parent=1 // pred_check
      _
    $region35: #{tpu_custom_call.1} parent=1 // pred_check_branch
      %165 = sbr.rel (0) target = $region37
    $region36: #{tpu_custom_call.1} parent=1 // pred_region
      %166 = dma.done [#allocation9], 128
    $region37: #{tpu_custom_call.1} parent=1 // pred_fallthru
      _
    // Predicated region
    $region38: #{tpu_custom_call.1} parent=1 // pred_check
      _
    $region39: #{tpu_custom_call.1} parent=1 // pred_check_branch
      %168 = sbr.rel (0) target = $region41
    $region40: #{tpu_custom_call.1} parent=1 // pred_region
      %169 = dma.done [#allocation9], 128
    $region41: #{tpu_custom_call.1} parent=1 // pred_fallthru
      _
    %170 = vsyncpa [#allocation3], 1
    %171 = vsyncpa [#allocation6], 1
    %172 = vsyncpa [#allocation4], 1
    %173 = vsyncpa [#allocation9], 1

</llo_original>
